<compile_context>
chip_gen: v5e
topology: v5e:2x2
jax: 0.10.0
libtpu: 0.0.40
codegen_flags: <defaults>
</compile_context>

<pallas_src>
import jax
import jax.numpy as jnp
from jax.experimental import pallas as pl
from jax.experimental.pallas import tpu as pltpu

KERNEL_SIZES = (1, 2, 3, 4, 5, 6)


def _round_up(x, m):
    return (x + m - 1) // m * m


def _make_textcnn_kernel(TB, L, E, C, kernel_sizes, sum_kc, out_pad):
    n = len(kernel_sizes)
    nc = n * C

    def kernel(x_ref, w_ref, b_ref, out_ref):
        x = x_ref[...]                      # (TB, L, E)   bf16
        w = w_ref[...]                      # (E, sum_kc)  bf16

        # One fused lane-dense matmul for all branches / taps (f32 accumulate).
        p = jnp.dot(x.reshape(TB * L, E), w,
                    preferred_element_type=jnp.float32)
        p = p.reshape(TB, L, sum_kc)        # (TB, L, sum_kc) f32

        pooled = []
        col = 0
        for K in kernel_sizes:              # static unroll, K <= 6
            T = L - K + 1
            # tap 0 initializes the accumulator (no zeros init).
            acc = p[:, 0:T, col:col + C]
            for k in range(1, K):
                acc = acc + p[:, k:k + T, col + k * C:col + (k + 1) * C]
            pooled.append(jnp.max(acc, axis=1))            # (TB, C)
            col += K * C

        y = jnp.concatenate(pooled, axis=1)                # (TB, n*C)
        if out_pad > nc:
            y = jnp.concatenate(
                [y, jnp.zeros((TB, out_pad - nc), jnp.float32)], axis=1)
        # bias + ReLU after the pool (== relu-before-pool; pad bias is zero).
        y = jnp.maximum(y + b_ref[...], 0.0)
        out_ref[...] = y.astype(out_ref.dtype)             # single 128-lane store

    return kernel


def textcnn_forward(x, weights, biases):
    """x: (B, L, E); weights[i]: (K_i, E, C); biases[i]: (1, C) -> (B, n*C)."""
    B, L, E = x.shape
    C = int(weights[0].shape[-1])
    kernel_sizes = tuple(int(w.shape[0]) for w in weights)
    n = len(kernel_sizes)
    assert L >= max(kernel_sizes), "sequence shorter than largest conv kernel"

    nc = n * C
    sum_kc = sum(kernel_sizes) * C
    out_pad = _round_up(nc, 128)

    # Pack weights into (E, sum_kc); column blocks ordered by (branch, tap).
    w_cols = [w[k].astype(jnp.bfloat16)
              for w in weights for k in range(w.shape[0])]
    w_all = jnp.concatenate(w_cols, axis=1)                       # (E, sum_kc)
    b_all = jnp.concatenate([b.reshape(1, -1) for b in biases], axis=1)
    b_all = jnp.pad(b_all, ((0, 0), (0, out_pad - nc))).astype(jnp.float32)

    # Batch tiling: pad B up to a multiple-of-8 tile, grid over batch tiles.
    TB = min(128, _round_up(B, 8))
    B_pad = _round_up(B, TB)
    x_bf = x.astype(jnp.bfloat16)
    if B_pad != B:
        x_bf = jnp.pad(x_bf, ((0, B_pad - B), (0, 0), (0, 0)))
    grid = (B_pad // TB,)

    # VMEM budget: double-buffered x/out tiles + resident weights + P scratch.
    vmem_need = (2 * (TB * L * E * 2 + TB * out_pad * 4)
                 + 2 * (E * sum_kc * 2 + out_pad * 4)
                 + TB * L * sum_kc * 4)
    vmem_limit = int(min(max(4 * vmem_need, 16 * 1024 * 1024),
                         64 * 1024 * 1024))

    cost = pl.CostEstimate(
        flops=2 * B_pad * L * E * sum_kc,
        transcendentals=0,
        bytes_accessed=(B_pad * L * E * 2 + E * sum_kc * 2
                        + out_pad * 4 + B_pad * out_pad * 4))

    out = pl.pallas_call(
        _make_textcnn_kernel(TB, L, E, C, kernel_sizes, sum_kc, out_pad),
        out_shape=jax.ShapeDtypeStruct((B_pad, out_pad), jnp.float32),
        grid=grid,
        in_specs=[
            pl.BlockSpec((TB, L, E), lambda i: (i, 0, 0)),        # x batch tile
            pl.BlockSpec((E, sum_kc), lambda i: (0, 0)),          # resident W
            pl.BlockSpec((1, out_pad), lambda i: (0, 0)),         # resident bias
        ],
        out_specs=pl.BlockSpec((TB, out_pad), lambda i: (i, 0)),
        compiler_params=pltpu.CompilerParams(
            dimension_semantics=("parallel",),
            vmem_limit_bytes=vmem_limit),
        cost_estimate=cost,
    )(x_bf, w_all, b_all)

    return out[:B, :nc]


def textcnn_reference(x, weights, biases):
    """Pure-JAX reference (same math; matmul inputs cast to bf16 like the kernel)."""
    x16 = x.astype(jnp.bfloat16)
    outs = []
    for w, b in zip(weights, biases):
        K, E, C = w.shape
        T = x.shape[1] - K + 1
        w16 = w.astype(jnp.bfloat16)
        acc = jnp.zeros((x.shape[0], T, C), jnp.float32)
        for k in range(K):
            acc = acc + jnp.einsum("bte,ec->btc", x16[:, k:k + T, :], w16[k],
                                   preferred_element_type=jnp.float32)
        pooled = jnp.max(acc, axis=1)
        outs.append(jnp.maximum(pooled + b, 0.0))
    return jnp.concatenate(outs, axis=1)


def init_params(key, embedding_size, hidden_size):
    """Deterministic synthetic init matching nn.Conv2d(1, C, (K, E)) shapes."""
    channel = hidden_size * 2 // len(KERNEL_SIZES)
    weights, biases = [], []
    for i, K in enumerate(KERNEL_SIZES):
        kw, kb = jax.random.split(jax.random.fold_in(key, i))
        fan_in = K * embedding_size
        # PyTorch weight (C, 1, K, E) stored here transposed as (K, E, C).
        w = jax.random.normal(kw, (K, embedding_size, channel), jnp.float32)
        w = w * (1.0 / jnp.sqrt(fan_in))
        b = 0.1 * jax.random.normal(kb, (1, channel), jnp.float32)
        weights.append(w)
        biases.append(b)
    return weights, biases


if __name__ == "__main__":
    key = jax.random.PRNGKey(0)
    B, L, E = 2, 8, 32          # batch, seq_len, embedding_size
    hidden_size = 48            # -> channel = 48*2//6 = 16, output (2, 96)

    kx, kp = jax.random.split(key)
    x = jax.random.normal(kx, (B, L, E), jnp.float32)
    weights, biases = init_params(kp, E, hidden_size)

    out = jax.block_until_ready(textcnn_forward(x, weights, biases))
    ref = textcnn_reference(x, weights, biases)

    assert out.shape == (B, hidden_size * 2), out.shape
    assert jnp.allclose(out, ref, atol=1e-3, rtol=1e-3), (
        "mismatch vs reference, max abs err = "
        f"{float(jnp.max(jnp.abs(out - ref)))}")

    print("KERNEL_OK")
</pallas_src>

<mosaic_0001>
module attributes {stable_mosaic.version = 11 : i64} {
  func.func @kernel(%arg0: i32, %arg1: memref<8x8x32xbf16, #tpu.memory_space<vmem>>, %arg2: memref<32x336xbf16, #tpu.memory_space<vmem>>, %arg3: memref<1x128xf32, #tpu.memory_space<vmem>>, %arg4: memref<8x128xf32, #tpu.memory_space<vmem>>) attributes {dimension_semantics = [#tpu.dimension_semantics<parallel>], iteration_bounds = array<i64: 1>, scalar_prefetch = 0 : i64, scratch_operands = 0 : i64, tpu.core_type = #tpu.core_type<tc>, window_params = [{transform_indices = @transform_0, window_bounds = array<i64: 8, 8, 32>}, {pipeline_mode = #tpu.pipeline_mode<synchronous>, transform_indices = @transform_1, window_bounds = array<i64: 32, 336>}, {pipeline_mode = #tpu.pipeline_mode<synchronous>, transform_indices = @transform_2, window_bounds = array<i64: 1, 128>}, {transform_indices = @transform_3, window_bounds = array<i64: 8, 128>}]} {
    %c0 = arith.constant 0 : index
    %c0_0 = arith.constant 0 : index
    %c0_1 = arith.constant 0 : index
    %0 = vector.load %arg1[%c0, %c0_0, %c0_1] : memref<8x8x32xbf16, #tpu.memory_space<vmem>>, vector<8x8x32xbf16>
    %c0_2 = arith.constant 0 : index
    %c0_3 = arith.constant 0 : index
    %1 = vector.load %arg2[%c0_2, %c0_3] : memref<32x336xbf16, #tpu.memory_space<vmem>>, vector<32x336xbf16>
    %2 = vector.shape_cast %0 : vector<8x8x32xbf16> to vector<64x32xbf16>
    %cst = arith.constant dense<0.000000e+00> : vector<64x336xf32>
    %3 = tpu.matmul %2, %1, %cst {dimension_numbers = #tpu.dot_dimension_numbers<[1], [0], [0], [1], [0, 0, 1, 1], [], []>} : vector<64x32xbf16>, vector<32x336xbf16>, vector<64x336xf32> -> vector<64x336xf32>
    %4 = vector.shape_cast %3 : vector<64x336xf32> to vector<8x8x336xf32>
    %5 = vector.extract_strided_slice %4 {offsets = [0, 0, 0], sizes = [8, 8, 16], strides = [1, 1, 1]} : vector<8x8x336xf32> to vector<8x8x16xf32>
    %cst_4 = arith.constant dense<0xFF800000> : vector<8x16xf32>
    %6 = vector.multi_reduction <maximumf>, %5, %cst_4 [1] : vector<8x8x16xf32> to vector<8x16xf32>
    %7 = vector.extract_strided_slice %4 {offsets = [0, 0, 16], sizes = [8, 7, 16], strides = [1, 1, 1]} : vector<8x8x336xf32> to vector<8x7x16xf32>
    %8 = vector.extract_strided_slice %4 {offsets = [0, 1, 32], sizes = [8, 7, 16], strides = [1, 1, 1]} : vector<8x8x336xf32> to vector<8x7x16xf32>
    %9 = arith.addf %7, %8 : vector<8x7x16xf32>
    %cst_5 = arith.constant dense<0xFF800000> : vector<8x16xf32>
    %10 = vector.multi_reduction <maximumf>, %9, %cst_5 [1] : vector<8x7x16xf32> to vector<8x16xf32>
    %11 = vector.extract_strided_slice %4 {offsets = [0, 0, 48], sizes = [8, 6, 16], strides = [1, 1, 1]} : vector<8x8x336xf32> to vector<8x6x16xf32>
    %12 = vector.extract_strided_slice %4 {offsets = [0, 1, 64], sizes = [8, 6, 16], strides = [1, 1, 1]} : vector<8x8x336xf32> to vector<8x6x16xf32>
    %13 = arith.addf %11, %12 : vector<8x6x16xf32>
    %14 = vector.extract_strided_slice %4 {offsets = [0, 2, 80], sizes = [8, 6, 16], strides = [1, 1, 1]} : vector<8x8x336xf32> to vector<8x6x16xf32>
    %15 = arith.addf %13, %14 : vector<8x6x16xf32>
    %cst_6 = arith.constant dense<0xFF800000> : vector<8x16xf32>
    %16 = vector.multi_reduction <maximumf>, %15, %cst_6 [1] : vector<8x6x16xf32> to vector<8x16xf32>
    %17 = vector.extract_strided_slice %4 {offsets = [0, 0, 96], sizes = [8, 5, 16], strides = [1, 1, 1]} : vector<8x8x336xf32> to vector<8x5x16xf32>
    %18 = vector.extract_strided_slice %4 {offsets = [0, 1, 112], sizes = [8, 5, 16], strides = [1, 1, 1]} : vector<8x8x336xf32> to vector<8x5x16xf32>
    %19 = arith.addf %17, %18 : vector<8x5x16xf32>
    %20 = vector.extract_strided_slice %4 {offsets = [0, 2, 128], sizes = [8, 5, 16], strides = [1, 1, 1]} : vector<8x8x336xf32> to vector<8x5x16xf32>
    %21 = arith.addf %19, %20 : vector<8x5x16xf32>
    %22 = vector.extract_strided_slice %4 {offsets = [0, 3, 144], sizes = [8, 5, 16], strides = [1, 1, 1]} : vector<8x8x336xf32> to vector<8x5x16xf32>
    %23 = arith.addf %21, %22 : vector<8x5x16xf32>
    %cst_7 = arith.constant dense<0xFF800000> : vector<8x16xf32>
    %24 = vector.multi_reduction <maximumf>, %23, %cst_7 [1] : vector<8x5x16xf32> to vector<8x16xf32>
    %25 = vector.extract_strided_slice %4 {offsets = [0, 0, 160], sizes = [8, 4, 16], strides = [1, 1, 1]} : vector<8x8x336xf32> to vector<8x4x16xf32>
    %26 = vector.extract_strided_slice %4 {offsets = [0, 1, 176], sizes = [8, 4, 16], strides = [1, 1, 1]} : vector<8x8x336xf32> to vector<8x4x16xf32>
    %27 = arith.addf %25, %26 : vector<8x4x16xf32>
    %28 = vector.extract_strided_slice %4 {offsets = [0, 2, 192], sizes = [8, 4, 16], strides = [1, 1, 1]} : vector<8x8x336xf32> to vector<8x4x16xf32>
    %29 = arith.addf %27, %28 : vector<8x4x16xf32>
    %30 = vector.extract_strided_slice %4 {offsets = [0, 3, 208], sizes = [8, 4, 16], strides = [1, 1, 1]} : vector<8x8x336xf32> to vector<8x4x16xf32>
    %31 = arith.addf %29, %30 : vector<8x4x16xf32>
    %32 = vector.extract_strided_slice %4 {offsets = [0, 4, 224], sizes = [8, 4, 16], strides = [1, 1, 1]} : vector<8x8x336xf32> to vector<8x4x16xf32>
    %33 = arith.addf %31, %32 : vector<8x4x16xf32>
    %cst_8 = arith.constant dense<0xFF800000> : vector<8x16xf32>
    %34 = vector.multi_reduction <maximumf>, %33, %cst_8 [1] : vector<8x4x16xf32> to vector<8x16xf32>
    %35 = vector.extract_strided_slice %4 {offsets = [0, 0, 240], sizes = [8, 3, 16], strides = [1, 1, 1]} : vector<8x8x336xf32> to vector<8x3x16xf32>
    %36 = vector.extract_strided_slice %4 {offsets = [0, 1, 256], sizes = [8, 3, 16], strides = [1, 1, 1]} : vector<8x8x336xf32> to vector<8x3x16xf32>
    %37 = arith.addf %35, %36 : vector<8x3x16xf32>
    %38 = vector.extract_strided_slice %4 {offsets = [0, 2, 272], sizes = [8, 3, 16], strides = [1, 1, 1]} : vector<8x8x336xf32> to vector<8x3x16xf32>
    %39 = arith.addf %37, %38 : vector<8x3x16xf32>
    %40 = vector.extract_strided_slice %4 {offsets = [0, 3, 288], sizes = [8, 3, 16], strides = [1, 1, 1]} : vector<8x8x336xf32> to vector<8x3x16xf32>
    %41 = arith.addf %39, %40 : vector<8x3x16xf32>
    %42 = vector.extract_strided_slice %4 {offsets = [0, 4, 304], sizes = [8, 3, 16], strides = [1, 1, 1]} : vector<8x8x336xf32> to vector<8x3x16xf32>
    %43 = arith.addf %41, %42 : vector<8x3x16xf32>
    %44 = vector.extract_strided_slice %4 {offsets = [0, 5, 320], sizes = [8, 3, 16], strides = [1, 1, 1]} : vector<8x8x336xf32> to vector<8x3x16xf32>
    %45 = arith.addf %43, %44 : vector<8x3x16xf32>
    %cst_9 = arith.constant dense<0xFF800000> : vector<8x16xf32>
    %46 = vector.multi_reduction <maximumf>, %45, %cst_9 [1] : vector<8x3x16xf32> to vector<8x16xf32>
    %47 = tpu.concatenate %6, %10, %16, %24, %34, %46 in 1 : vector<8x16xf32>, vector<8x16xf32>, vector<8x16xf32>, vector<8x16xf32>, vector<8x16xf32>, vector<8x16xf32> -> vector<8x96xf32>
    %cst_10 = arith.constant 0.000000e+00 : f32
    %48 = vector.broadcast %cst_10 : f32 to vector<8x32xf32>
    %49 = tpu.concatenate %47, %48 in 1 : vector<8x96xf32>, vector<8x32xf32> -> vector<8x128xf32>
    %c0_11 = arith.constant 0 : index
    %c0_12 = arith.constant 0 : index
    %50 = vector.load %arg3[%c0_11, %c0_12] : memref<1x128xf32, #tpu.memory_space<vmem>>, vector<1x128xf32>
    %51 = vector.broadcast %50 : vector<1x128xf32> to vector<8x128xf32>
    %52 = arith.addf %49, %51 : vector<8x128xf32>
    %cst_13 = arith.constant 0.000000e+00 : f32
    %53 = vector.broadcast %cst_13 : f32 to vector<8x128xf32>
    %54 = arith.maximumf %52, %53 : vector<8x128xf32>
    %c0_14 = arith.constant 0 : index
    %c0_15 = arith.constant 0 : index
    %55 = vector.load %arg4[%c0_14, %c0_15] : memref<8x128xf32, #tpu.memory_space<vmem>>, vector<8x128xf32>
    tpu.vector_store %arg4[%c0_14, %c0_15], %54 {strides = array<i32>} : memref<8x128xf32, #tpu.memory_space<vmem>>, vector<8x128xf32>,
    return
  }
  func.func @transform_0(%arg0: i32) -> (i32, i32, i32) {
    %c0_i32 = arith.constant 0 : i32
    %c0_i32_0 = arith.constant 0 : i32
    %c0_i32_1 = arith.constant 0 : i32
    return %arg0, %c0_i32, %c0_i32_0 : i32, i32, i32
  }
  func.func @transform_1(%arg0: i32) -> (i32, i32) {
    %c0_i32 = arith.constant 0 : i32
    %c0_i32_0 = arith.constant 0 : i32
    %c0_i32_1 = arith.constant 0 : i32
    return %c0_i32, %c0_i32_0 : i32, i32
  }
  func.func @transform_2(%arg0: i32) -> (i32, i32) {
    %c0_i32 = arith.constant 0 : i32
    %c0_i32_0 = arith.constant 0 : i32
    %c0_i32_1 = arith.constant 0 : i32
    return %c0_i32, %c0_i32_0 : i32, i32
  }
  func.func @transform_3(%arg0: i32) -> (i32, i32) {
    %c0_i32 = arith.constant 0 : i32
    %c0_i32_0 = arith.constant 0 : i32
    return %arg0, %c0_i32 : i32, i32
  }
}

</mosaic_0001>

<llo_original>
// kernel: tpu_custom_call.1
$region0: #{tpu_custom_call.1}
  #allocation0 [shape = 'u32[]', space=smem, size = 0x4, offset = 0x4, fixed_abs, tag = 'smem constant byte address 0x4 - core index']
  #allocation1 [shape = 'u32[72,128]{1,0:T(1,128)}', space=vmem, size = 0x9000, scoped, tag = 'internal scratch']
  %s0 = inlined_call_operand.hbm [shape: bf16[8,8,32], index: 0, kind: input, shape index: {}]
  %s1 = inlined_call_operand.hbm [shape: bf16[32,336], index: 1, kind: input, shape index: {}]
  %s2 = inlined_call_operand.vmem [shape: f32[1,128], index: 2, kind: input, shape index: {}]
  %s3 = inlined_call_operand.hbm [shape: f32[8,128], index: 3, kind: output, shape index: {}]
  %s4 = sld [smem:[#allocation0]]
  $region30: #{tpu_custom_call.1} parent=0
    _
  %s6 = ssub.s32 1, %s4
  %s7 = scalar_select 0, %s6, %s4
  $region1: #{tpu_custom_call.1} parent=0
    #allocation2 [shape = 'u8[16384]{0}', space=vmem, size = 0x4000, scoped, tag = 'input window, operand 0, single buffered']
    #allocation3 [shape = 's32[1]{0}', space=sflag, size = 0x4, scoped, tag = 'scoped memory for tpu_custom_call.1']
    #allocation4 [shape = 's32[1]{0}', space=sflag, size = 0x4, scoped, tag = 'scoped memory for tpu_custom_call.1']
    #allocation5 [shape = 'u8[24576]{0}', space=vmem, size = 0x6000, scoped, tag = 'input window, operand 1, single buffered']
    #allocation6 [shape = 's32[1]{0}', space=sflag, size = 0x4, scoped, tag = 'scoped memory for tpu_custom_call.1']
    #allocation7 [shape = 'u8[4096]{0}', space=vmem, size = 0x1000, scoped, tag = 'output window, operand 0, single buffered']
    %8 = vsyncpa [#allocation3], 0
    %9 = vsyncpa [#allocation6], 0
    %10 = vsyncpa [#allocation4], 0
    // Predicated region
    $region2: #{tpu_custom_call.1} parent=1 // pred_check
      _
    $region3: #{tpu_custom_call.1} parent=1 // pred_check_branch
      %12 = sbr.rel (0) target = $region5
    $region4: #{tpu_custom_call.1} parent=1 // pred_region
      %14 = vsyncadd [#allocation3], 0
      %s15 = sshll.u32 %s0, 4
      %s16 = int_to_ptr.hbm [resolvable:$true] %s15
      %s17 = sshll.u32 [#allocation2], 4
      %s18 = int_to_ptr.vmem [resolvable:$true] %s17
      %23 = dma.hbm_to_vmem [thread:$0]  %s16, 512, %s18, [#allocation3], 64, 64, 4
    $region5: #{tpu_custom_call.1} parent=1 // pred_fallthru
      _
    // Predicated region
    $region6: #{tpu_custom_call.1} parent=1 // pred_check
      _
    $region7: #{tpu_custom_call.1} parent=1 // pred_check_branch
      %25 = sbr.rel (0) target = $region9
    $region8: #{tpu_custom_call.1} parent=1 // pred_region
      %27 = vsyncadd [#allocation6], 0
      %s28 = sshll.u32 %s1, 4
      %s29 = int_to_ptr.hbm [resolvable:$true] %s28
      %s30 = sshll.u32 [#allocation5], 4
      %s31 = int_to_ptr.vmem [resolvable:$true] %s30
      %36 = dma.hbm_to_vmem [thread:$0]  %s29, 768, %s31, [#allocation6], 192, 192, 12
    $region9: #{tpu_custom_call.1} parent=1 // pred_fallthru
      _
    // Predicated region
    $region10: #{tpu_custom_call.1} parent=1 // pred_check
      _
    $region11: #{tpu_custom_call.1} parent=1 // pred_check_branch
      %38 = sbr.rel (0) target = $region13
    $region12: #{tpu_custom_call.1} parent=1 // pred_region
      _
    $region13: #{tpu_custom_call.1} parent=1 // pred_fallthru
      _
    // Predicated region
    $region14: #{tpu_custom_call.1} parent=1 // pred_check
      _
    $region15: #{tpu_custom_call.1} parent=1 // pred_check_branch
      %40 = sbr.rel (0) target = $region17
    $region16: #{tpu_custom_call.1} parent=1 // pred_region
      %42 = dma.done [#allocation3], 512
    $region17: #{tpu_custom_call.1} parent=1 // pred_fallthru
      _
    // Predicated region
    $region18: #{tpu_custom_call.1} parent=1 // pred_check
      _
    $region19: #{tpu_custom_call.1} parent=1 // pred_check_branch
      %44 = sbr.rel (0) target = $region21
    $region20: #{tpu_custom_call.1} parent=1 // pred_region
      %46 = dma.done [#allocation6], 768
    $region21: #{tpu_custom_call.1} parent=1 // pred_fallthru
      _
    %v48 = vld [vmem:[#allocation2] sm:$0xf]
    %v49 = vld [vmem:[#allocation2 + $0x4] sm:$0xf]
    %v50 = vld [vmem:[#allocation2 + $0x8] sm:$0xf]
    %v51 = vld [vmem:[#allocation2 + $0xc] sm:$0xf]
    %v52 = vld [vmem:[#allocation2 + $0x10] sm:$0xf]
    %v53 = vld [vmem:[#allocation2 + $0x14] sm:$0xf]
    %v54 = vld [vmem:[#allocation2 + $0x18] sm:$0xf]
    %v55 = vld [vmem:[#allocation2 + $0x1c] sm:$0xf]
    %v56 = vld [vmem:[#allocation5] sm:$0xff]
    %v57 = vld [vmem:[#allocation5 + $0x8] sm:$0xf]
    %v58 = vld [vmem:[#allocation5 + $0xc] sm:$0xff]
    %v59 = vld [vmem:[#allocation5 + $0x14] sm:$0xf]
    %v60 = vld [vmem:[#allocation5 + $0x18] sm:$0xff]
    %v61 = vld [vmem:[#allocation5 + $0x20] sm:$0xf]
    %v62 = vld [vmem:[#allocation5 + $0x24] sm:$0xff]
    %v63 = vld [vmem:[#allocation5 + $0x2c] sm:$0xf]
    %v72 = vunpack.c.l.b16 %v48
    %v73 = vunpack.c.l.b16 %v49
    %v74 = vunpack.c.l.b16 %v50
    %v75 = vunpack.c.l.b16 %v51
    %v76 = vunpack.c.l.b16 %v52
    %v77 = vunpack.c.l.b16 %v53
    %v78 = vunpack.c.l.b16 %v54
    %v79 = vunpack.c.l.b16 %v55
    %v80 = vpack.c.b16 %v73, %v72
    %v81 = vpack.c.b16 %v75, %v74
    %v82 = vpack.c.b16 %v77, %v76
    %v83 = vpack.c.b16 %v79, %v78
    %v92 = vunpack.c.l.b16 %v56
    %v93 = vunpack.c.h.b16 %v56
    %v94 = vunpack.c.l.b16 %v57
    %v95 = vunpack.c.l.b16 %v58
    %v96 = vunpack.c.h.b16 %v58
    %v97 = vunpack.c.l.b16 %v59
    %v98 = vunpack.c.l.b16 %v60
    %v99 = vunpack.c.h.b16 %v60
    %v100 = vunpack.c.l.b16 %v61
    %v101 = vunpack.c.l.b16 %v62
    %v102 = vunpack.c.h.b16 %v62
    %v103 = vunpack.c.l.b16 %v63
    %v104 = vpack.c.b16 %v95, %v92
    %v105 = vpack.c.b16 %v96, %v93
    %v106 = vpack.c.b16 %v97, %v94
    %v107 = vpack.c.b16 %v101, %v98
    %v108 = vpack.c.b16 %v102, %v99
    %v109 = vpack.c.b16 %v103, %v100
    %vm116 = vcmask 261120
    %v118 = vsel %vm116, %v80, 0
    %v121 = vsel %vm116, %v81, 0
    %v124 = vsel %vm116, %v82, 0
    %v127 = vsel %vm116, %v83, 0
    %129 = vmatpush.bf16.msra.mxu0 0
    %130 = vmatpush.bf16.msra.mxu0 0
    %131 = vmatpush.bf16.msra.mxu0 0
    %132 = vmatpush.bf16.msra.mxu0 0
    %133 = vmatpush.bf16.msra.mxu0 0
    %134 = vmatpush.bf16.msra.mxu0 0
    %135 = vmatpush.bf16.msra.mxu0 %v107
    %136 = vmatpush.bf16.msra.mxu0 %v104
    %137 = vmatmul.bf16.gmra.mxu0 %v118
    %v138 = vpop.f32.mrf.mxu0
    %v139 = vadd.f32 0.0, %v138
    %v140 = vpop.f32.mrf.mxu0
    %v141 = vadd.f32 0.0, %v140
    %142 = vmatmul.bf16.gmra.mxu0 %v121
    %v143 = vpop.f32.mrf.mxu0
    %v144 = vadd.f32 0.0, %v143
    %v145 = vpop.f32.mrf.mxu0
    %v146 = vadd.f32 0.0, %v145
    %147 = vmatmul.bf16.gmra.mxu0 %v124
    %v148 = vpop.f32.mrf.mxu0
    %v149 = vadd.f32 0.0, %v148
    %v150 = vpop.f32.mrf.mxu0
    %v151 = vadd.f32 0.0, %v150
    %152 = vmatmul.bf16.gmra.mxu0 %v127
    %v153 = vpop.f32.mrf.mxu0
    %v154 = vadd.f32 0.0, %v153
    %v155 = vpop.f32.mrf.mxu0
    %v156 = vadd.f32 0.0, %v155
    %157 = vdwg.mxu0
    %158 = vmatpush.bf16.msra.mxu0 0
    %159 = vmatpush.bf16.msra.mxu0 0
    %160 = vmatpush.bf16.msra.mxu0 0
    %161 = vmatpush.bf16.msra.mxu0 0
    %162 = vmatpush.bf16.msra.mxu0 0
    %163 = vmatpush.bf16.msra.mxu0 0
    %164 = vmatpush.bf16.msra.mxu0 %v108
    %165 = vmatpush.bf16.msra.mxu0 %v105
    %166 = vmatmul.bf16.gmra.mxu0 %v118
    %v167 = vpop.f32.mrf.mxu0
    %v168 = vadd.f32 0.0, %v167
    %v169 = vpop.f32.mrf.mxu0
    %v170 = vadd.f32 0.0, %v169
    %171 = vmatmul.bf16.gmra.mxu0 %v121
    %v172 = vpop.f32.mrf.mxu0
    %v173 = vadd.f32 0.0, %v172
    %v174 = vpop.f32.mrf.mxu0
    %v175 = vadd.f32 0.0, %v174
    %176 = vmatmul.bf16.gmra.mxu0 %v124
    %v177 = vpop.f32.mrf.mxu0
    %v178 = vadd.f32 0.0, %v177
    %v179 = vpop.f32.mrf.mxu0
    %v180 = vadd.f32 0.0, %v179
    %181 = vmatmul.bf16.gmra.mxu0 %v127
    %v182 = vpop.f32.mrf.mxu0
    %v183 = vadd.f32 0.0, %v182
    %v184 = vpop.f32.mrf.mxu0
    %v185 = vadd.f32 0.0, %v184
    %186 = vdwg.mxu0
    %187 = vmatpush.bf16.msra.mxu0 0
    %188 = vmatpush.bf16.msra.mxu0 0
    %189 = vmatpush.bf16.msra.mxu0 0
    %190 = vmatpush.bf16.msra.mxu0 0
    %191 = vmatpush.bf16.msra.mxu0 0
    %192 = vmatpush.bf16.msra.mxu0 0
    %193 = vmatpush.bf16.msra.mxu0 %v109
    %194 = vmatpush.bf16.msra.mxu0 %v106
    %195 = vmatmul.bf16.gmra.mxu0 %v118
    %v196 = vpop.f32.mrf.mxu0
    %v197 = vadd.f32 0.0, %v196
    %v198 = vpop.f32.mrf.mxu0
    %v199 = vadd.f32 0.0, %v198
    %200 = vmatmul.bf16.gmra.mxu0 %v121
    %v201 = vpop.f32.mrf.mxu0
    %v202 = vadd.f32 0.0, %v201
    %v203 = vpop.f32.mrf.mxu0
    %v204 = vadd.f32 0.0, %v203
    %205 = vmatmul.bf16.gmra.mxu0 %v124
    %v206 = vpop.f32.mrf.mxu0
    %v207 = vadd.f32 0.0, %v206
    %v208 = vpop.f32.mrf.mxu0
    %v209 = vadd.f32 0.0, %v208
    %210 = vmatmul.bf16.gmra.mxu0 %v127
    %v211 = vpop.f32.mrf.mxu0
    %v212 = vadd.f32 0.0, %v211
    %v213 = vpop.f32.mrf.mxu0
    %v214 = vadd.f32 0.0, %v213
    %215 = vdwg.mxu0
    %vm216 = vcmask 130048
    %v217 = vsel %vm216, %v139, -inf
    %v218 = vrot.slane %v217, 4
    %v219 = vmax.f32 %v217, %v218
    %v220 = vrot.slane %v219, 2
    %v221 = vmax.f32 %v219, %v220
    %v222 = vrot.slane %v221, 1
    %v223 = vmax.f32 %v221, %v222
    %v224 = vsel %vm216, %v141, -inf
    %v225 = vrot.slane %v224, 4
    %v226 = vmax.f32 %v224, %v225
    %v227 = vrot.slane %v226, 2
    %v228 = vmax.f32 %v226, %v227
    %v229 = vrot.slane %v228, 1
    %v230 = vmax.f32 %v228, %v229
    %v231 = vsel %vm216, %v144, -inf
    %v232 = vrot.slane %v231, 4
    %v233 = vmax.f32 %v231, %v232
    %v234 = vrot.slane %v233, 2
    %v235 = vmax.f32 %v233, %v234
    %v236 = vrot.slane %v235, 1
    %v237 = vmax.f32 %v235, %v236
    %v238 = vsel %vm216, %v146, -inf
    %v239 = vrot.slane %v238, 4
    %v240 = vmax.f32 %v238, %v239
    %v241 = vrot.slane %v240, 2
    %v242 = vmax.f32 %v240, %v241
    %v243 = vrot.slane %v242, 1
    %v244 = vmax.f32 %v242, %v243
    %v245 = vsel %vm216, %v149, -inf
    %v246 = vrot.slane %v245, 4
    %v247 = vmax.f32 %v245, %v246
    %v248 = vrot.slane %v247, 2
    %v249 = vmax.f32 %v247, %v248
    %v250 = vrot.slane %v249, 1
    %v251 = vmax.f32 %v249, %v250
    %v252 = vsel %vm216, %v151, -inf
    %v253 = vrot.slane %v252, 4
    %v254 = vmax.f32 %v252, %v253
    %v255 = vrot.slane %v254, 2
    %v256 = vmax.f32 %v254, %v255
    %v257 = vrot.slane %v256, 1
    %v258 = vmax.f32 %v256, %v257
    %v259 = vsel %vm216, %v154, -inf
    %v260 = vrot.slane %v259, 4
    %v261 = vmax.f32 %v259, %v260
    %v262 = vrot.slane %v261, 2
    %v263 = vmax.f32 %v261, %v262
    %v264 = vrot.slane %v263, 1
    %v265 = vmax.f32 %v263, %v264
    %v266 = vsel %vm216, %v156, -inf
    %v267 = vrot.slane %v266, 4
    %v268 = vmax.f32 %v266, %v267
    %v269 = vrot.slane %v268, 2
    %v270 = vmax.f32 %v268, %v269
    %v271 = vrot.slane %v270, 1
    %v272 = vmax.f32 %v270, %v271
    %v281 = vrot.slane %v139, 1
    %v282 = vrot.slane %v141, 1
    %v283 = vrot.slane %v144, 1
    %v284 = vrot.slane %v146, 1
    %v285 = vrot.slane %v149, 1
    %v286 = vrot.slane %v151, 1
    %v287 = vrot.slane %v154, 1
    %v288 = vrot.slane %v156, 1
    %289 = vrot.lane.b32.xlu0 %v281, 112
    %v290 = vpop.permute.xlu0 %289
    %291 = vrot.lane.b32.xlu0 %v282, 112
    %v292 = vpop.permute.xlu0 %291
    %293 = vrot.lane.b32.xlu0 %v283, 112
    %v294 = vpop.permute.xlu0 %293
    %295 = vrot.lane.b32.xlu0 %v284, 112
    %v296 = vpop.permute.xlu0 %295
    %297 = vrot.lane.b32.xlu0 %v285, 112
    %v298 = vpop.permute.xlu0 %297
    %299 = vrot.lane.b32.xlu0 %v286, 112
    %v300 = vpop.permute.xlu0 %299
    %301 = vrot.lane.b32.xlu0 %v287, 112
    %v302 = vpop.permute.xlu0 %301
    %303 = vrot.lane.b32.xlu0 %v288, 112
    %v304 = vpop.permute.xlu0 %303
    %v313 = vadd.f32 %v139, %v290
    %v314 = vadd.f32 %v141, %v292
    %v315 = vadd.f32 %v144, %v294
    %v316 = vadd.f32 %v146, %v296
    %v317 = vadd.f32 %v149, %v298
    %v318 = vadd.f32 %v151, %v300
    %v319 = vadd.f32 %v154, %v302
    %v320 = vadd.f32 %v156, %v304
    %vm321 = vcmask 260224
    %v322 = vsel %vm321, %v313, -inf
    %v323 = vrot.slane %v322, 4
    %v324 = vmax.f32 %v322, %v323
    %v325 = vrot.slane %v324, 2
    %v326 = vmax.f32 %v324, %v325
    %v327 = vrot.slane %v326, 1
    %v328 = vmax.f32 %v326, %v327
    %v329 = vsel %vm321, %v314, -inf
    %v330 = vrot.slane %v329, 4
    %v331 = vmax.f32 %v329, %v330
    %v332 = vrot.slane %v331, 2
    %v333 = vmax.f32 %v331, %v332
    %v334 = vrot.slane %v333, 1
    %v335 = vmax.f32 %v333, %v334
    %v336 = vsel %vm321, %v315, -inf
    %v337 = vrot.slane %v336, 4
    %v338 = vmax.f32 %v336, %v337
    %v339 = vrot.slane %v338, 2
    %v340 = vmax.f32 %v338, %v339
    %v341 = vrot.slane %v340, 1
    %v342 = vmax.f32 %v340, %v341
    %v343 = vsel %vm321, %v316, -inf
    %v344 = vrot.slane %v343, 4
    %v345 = vmax.f32 %v343, %v344
    %v346 = vrot.slane %v345, 2
    %v347 = vmax.f32 %v345, %v346
    %v348 = vrot.slane %v347, 1
    %v349 = vmax.f32 %v347, %v348
    %v350 = vsel %vm321, %v317, -inf
    %v351 = vrot.slane %v350, 4
    %v352 = vmax.f32 %v350, %v351
    %v353 = vrot.slane %v352, 2
    %v354 = vmax.f32 %v352, %v353
    %v355 = vrot.slane %v354, 1
    %v356 = vmax.f32 %v354, %v355
    %v357 = vsel %vm321, %v318, -inf
    %v358 = vrot.slane %v357, 4
    %v359 = vmax.f32 %v357, %v358
    %v360 = vrot.slane %v359, 2
    %v361 = vmax.f32 %v359, %v360
    %v362 = vrot.slane %v361, 1
    %v363 = vmax.f32 %v361, %v362
    %v364 = vsel %vm321, %v319, -inf
    %v365 = vrot.slane %v364, 4
    %v366 = vmax.f32 %v364, %v365
    %v367 = vrot.slane %v366, 2
    %v368 = vmax.f32 %v366, %v367
    %v369 = vrot.slane %v368, 1
    %v370 = vmax.f32 %v368, %v369
    %v371 = vsel %vm321, %v320, -inf
    %v372 = vrot.slane %v371, 4
    %v373 = vmax.f32 %v371, %v372
    %v374 = vrot.slane %v373, 2
    %v375 = vmax.f32 %v373, %v374
    %v376 = vrot.slane %v375, 1
    %v377 = vmax.f32 %v375, %v376
    %v378 = vrot.slane %v139, 2
    %v379 = vrot.slane %v141, 2
    %v380 = vrot.slane %v144, 2
    %v381 = vrot.slane %v146, 2
    %v382 = vrot.slane %v149, 2
    %v383 = vrot.slane %v151, 2
    %v384 = vrot.slane %v154, 2
    %v385 = vrot.slane %v156, 2
    %386 = vrot.lane.b32.xlu0 %v378, 96
    %v387 = vpop.permute.xlu0 %386
    %388 = vrot.lane.b32.xlu0 %v379, 96
    %v389 = vpop.permute.xlu0 %388
    %390 = vrot.lane.b32.xlu0 %v380, 96
    %v391 = vpop.permute.xlu0 %390
    %392 = vrot.lane.b32.xlu0 %v381, 96
    %v393 = vpop.permute.xlu0 %392
    %394 = vrot.lane.b32.xlu0 %v382, 96
    %v395 = vpop.permute.xlu0 %394
    %396 = vrot.lane.b32.xlu0 %v383, 96
    %v397 = vpop.permute.xlu0 %396
    %398 = vrot.lane.b32.xlu0 %v384, 96
    %v399 = vpop.permute.xlu0 %398
    %400 = vrot.lane.b32.xlu0 %v385, 96
    %v401 = vpop.permute.xlu0 %400
    %v410 = vadd.f32 %v313, %v387
    %v411 = vadd.f32 %v314, %v389
    %v412 = vadd.f32 %v315, %v391
    %v413 = vadd.f32 %v316, %v393
    %v414 = vadd.f32 %v317, %v395
    %v415 = vadd.f32 %v318, %v397
    %v416 = vadd.f32 %v319, %v399
    %v417 = vadd.f32 %v320, %v401
    %vm418 = vcmask 521600
    %v419 = vsel %vm418, %v410, -inf
    %v420 = vrot.slane %v419, 4
    %v421 = vmax.f32 %v419, %v420
    %v422 = vrot.slane %v421, 2
    %v423 = vmax.f32 %v421, %v422
    %v424 = vrot.slane %v423, 1
    %v425 = vmax.f32 %v423, %v424
    %v426 = vsel %vm418, %v411, -inf
    %v427 = vrot.slane %v426, 4
    %v428 = vmax.f32 %v426, %v427
    %v429 = vrot.slane %v428, 2
    %v430 = vmax.f32 %v428, %v429
    %v431 = vrot.slane %v430, 1
    %v432 = vmax.f32 %v430, %v431
    %v433 = vsel %vm418, %v412, -inf
    %v434 = vrot.slane %v433, 4
    %v435 = vmax.f32 %v433, %v434
    %v436 = vrot.slane %v435, 2
    %v437 = vmax.f32 %v435, %v436
    %v438 = vrot.slane %v437, 1
    %v439 = vmax.f32 %v437, %v438
    %v440 = vsel %vm418, %v413, -inf
    %v441 = vrot.slane %v440, 4
    %v442 = vmax.f32 %v440, %v441
    %v443 = vrot.slane %v442, 2
    %v444 = vmax.f32 %v442, %v443
    %v445 = vrot.slane %v444, 1
    %v446 = vmax.f32 %v444, %v445
    %v447 = vsel %vm418, %v414, -inf
    %v448 = vrot.slane %v447, 4
    %v449 = vmax.f32 %v447, %v448
    %v450 = vrot.slane %v449, 2
    %v451 = vmax.f32 %v449, %v450
    %v452 = vrot.slane %v451, 1
    %v453 = vmax.f32 %v451, %v452
    %v454 = vsel %vm418, %v415, -inf
    %v455 = vrot.slane %v454, 4
    %v456 = vmax.f32 %v454, %v455
    %v457 = vrot.slane %v456, 2
    %v458 = vmax.f32 %v456, %v457
    %v459 = vrot.slane %v458, 1
    %v460 = vmax.f32 %v458, %v459
    %v461 = vsel %vm418, %v416, -inf
    %v462 = vrot.slane %v461, 4
    %v463 = vmax.f32 %v461, %v462
    %v464 = vrot.slane %v463, 2
    %v465 = vmax.f32 %v463, %v464
    %v466 = vrot.slane %v465, 1
    %v467 = vmax.f32 %v465, %v466
    %v468 = vsel %vm418, %v417, -inf
    %v469 = vrot.slane %v468, 4
    %v470 = vmax.f32 %v468, %v469
    %v471 = vrot.slane %v470, 2
    %v472 = vmax.f32 %v470, %v471
    %v473 = vrot.slane %v472, 1
    %v474 = vmax.f32 %v472, %v473
    %v483 = vrot.slane %v168, 2
    %v484 = vrot.slane %v170, 2
    %v485 = vrot.slane %v173, 2
    %v486 = vrot.slane %v175, 2
    %v487 = vrot.slane %v178, 2
    %v488 = vrot.slane %v180, 2
    %v489 = vrot.slane %v183, 2
    %v490 = vrot.slane %v185, 2
    %491 = vrot.lane.b32.xlu0 %v483, 96
    %v492 = vpop.permute.xlu0 %491
    %493 = vrot.lane.b32.xlu0 %v484, 96
    %v494 = vpop.permute.xlu0 %493
    %495 = vrot.lane.b32.xlu0 %v485, 96
    %v496 = vpop.permute.xlu0 %495
    %497 = vrot.lane.b32.xlu0 %v486, 96
    %v498 = vpop.permute.xlu0 %497
    %499 = vrot.lane.b32.xlu0 %v487, 96
    %v500 = vpop.permute.xlu0 %499
    %501 = vrot.lane.b32.xlu0 %v488, 96
    %v502 = vpop.permute.xlu0 %501
    %503 = vrot.lane.b32.xlu0 %v489, 96
    %v504 = vpop.permute.xlu0 %503
    %505 = vrot.lane.b32.xlu0 %v490, 96
    %v506 = vpop.permute.xlu0 %505
    %v515 = vadd.f32 %v313, %v492
    %v516 = vadd.f32 %v314, %v494
    %v517 = vadd.f32 %v315, %v496
    %v518 = vadd.f32 %v316, %v498
    %v519 = vadd.f32 %v317, %v500
    %v520 = vadd.f32 %v318, %v502
    %v521 = vadd.f32 %v319, %v504
    %v522 = vadd.f32 %v320, %v506
    %v523 = vrot.slane %v168, 3
    %v524 = vrot.slane %v170, 3
    %v525 = vrot.slane %v173, 3
    %v526 = vrot.slane %v175, 3
    %v527 = vrot.slane %v178, 3
    %v528 = vrot.slane %v180, 3
    %v529 = vrot.slane %v183, 3
    %v530 = vrot.slane %v185, 3
    %531 = vrot.lane.b32.xlu0 %v523, 80
    %v532 = vpop.permute.xlu0 %531
    %533 = vrot.lane.b32.xlu0 %v524, 80
    %v534 = vpop.permute.xlu0 %533
    %535 = vrot.lane.b32.xlu0 %v525, 80
    %v536 = vpop.permute.xlu0 %535
    %537 = vrot.lane.b32.xlu0 %v526, 80
    %v538 = vpop.permute.xlu0 %537
    %539 = vrot.lane.b32.xlu0 %v527, 80
    %v540 = vpop.permute.xlu0 %539
    %541 = vrot.lane.b32.xlu0 %v528, 80
    %v542 = vpop.permute.xlu0 %541
    %543 = vrot.lane.b32.xlu0 %v529, 80
    %v544 = vpop.permute.xlu0 %543
    %545 = vrot.lane.b32.xlu0 %v530, 80
    %v546 = vpop.permute.xlu0 %545
    %v555 = vadd.f32 %v515, %v532
    %v556 = vadd.f32 %v516, %v534
    %v557 = vadd.f32 %v517, %v536
    %v558 = vadd.f32 %v518, %v538
    %v559 = vadd.f32 %v519, %v540
    %v560 = vadd.f32 %v520, %v542
    %v561 = vadd.f32 %v521, %v544
    %v562 = vadd.f32 %v522, %v546
    %vm563 = vcmask 914176
    %v564 = vsel %vm563, %v555, -inf
    %v565 = vrot.slane %v564, 4
    %v566 = vmax.f32 %v564, %v565
    %v567 = vrot.slane %v566, 2
    %v568 = vmax.f32 %v566, %v567
    %v569 = vrot.slane %v568, 1
    %v570 = vmax.f32 %v568, %v569
    %v571 = vsel %vm563, %v556, -inf
    %v572 = vrot.slane %v571, 4
    %v573 = vmax.f32 %v571, %v572
    %v574 = vrot.slane %v573, 2
    %v575 = vmax.f32 %v573, %v574
    %v576 = vrot.slane %v575, 1
    %v577 = vmax.f32 %v575, %v576
    %v578 = vsel %vm563, %v557, -inf
    %v579 = vrot.slane %v578, 4
    %v580 = vmax.f32 %v578, %v579
    %v581 = vrot.slane %v580, 2
    %v582 = vmax.f32 %v580, %v581
    %v583 = vrot.slane %v582, 1
    %v584 = vmax.f32 %v582, %v583
    %v585 = vsel %vm563, %v558, -inf
    %v586 = vrot.slane %v585, 4
    %v587 = vmax.f32 %v585, %v586
    %v588 = vrot.slane %v587, 2
    %v589 = vmax.f32 %v587, %v588
    %v590 = vrot.slane %v589, 1
    %v591 = vmax.f32 %v589, %v590
    %v592 = vsel %vm563, %v559, -inf
    %v593 = vrot.slane %v592, 4
    %v594 = vmax.f32 %v592, %v593
    %v595 = vrot.slane %v594, 2
    %v596 = vmax.f32 %v594, %v595
    %v597 = vrot.slane %v596, 1
    %v598 = vmax.f32 %v596, %v597
    %v599 = vsel %vm563, %v560, -inf
    %v600 = vrot.slane %v599, 4
    %v601 = vmax.f32 %v599, %v600
    %v602 = vrot.slane %v601, 2
    %v603 = vmax.f32 %v601, %v602
    %v604 = vrot.slane %v603, 1
    %v605 = vmax.f32 %v603, %v604
    %v606 = vsel %vm563, %v561, -inf
    %v607 = vrot.slane %v606, 4
    %v608 = vmax.f32 %v606, %v607
    %v609 = vrot.slane %v608, 2
    %v610 = vmax.f32 %v608, %v609
    %v611 = vrot.slane %v610, 1
    %v612 = vmax.f32 %v610, %v611
    %v613 = vsel %vm563, %v562, -inf
    %v614 = vrot.slane %v613, 4
    %v615 = vmax.f32 %v613, %v614
    %v616 = vrot.slane %v615, 2
    %v617 = vmax.f32 %v615, %v616
    %v618 = vrot.slane %v617, 1
    %v619 = vmax.f32 %v617, %v618
    %v620 = vrot.slane %v168, 1
    %v621 = vrot.slane %v170, 1
    %v622 = vrot.slane %v173, 1
    %v623 = vrot.slane %v175, 1
    %v624 = vrot.slane %v178, 1
    %v625 = vrot.slane %v180, 1
    %v626 = vrot.slane %v183, 1
    %v627 = vrot.slane %v185, 1
    %628 = vrot.lane.b32.xlu0 %v620, 112
    %v629 = vpop.permute.xlu0 %628
    %630 = vrot.lane.b32.xlu0 %v621, 112
    %v631 = vpop.permute.xlu0 %630
    %632 = vrot.lane.b32.xlu0 %v622, 112
    %v633 = vpop.permute.xlu0 %632
    %634 = vrot.lane.b32.xlu0 %v623, 112
    %v635 = vpop.permute.xlu0 %634
    %636 = vrot.lane.b32.xlu0 %v624, 112
    %v637 = vpop.permute.xlu0 %636
    %638 = vrot.lane.b32.xlu0 %v625, 112
    %v639 = vpop.permute.xlu0 %638
    %640 = vrot.lane.b32.xlu0 %v626, 112
    %v641 = vpop.permute.xlu0 %640
    %642 = vrot.lane.b32.xlu0 %v627, 112
    %v643 = vpop.permute.xlu0 %642
    %v652 = vadd.f32 %v168, %v629
    %v653 = vadd.f32 %v170, %v631
    %v654 = vadd.f32 %v173, %v633
    %v655 = vadd.f32 %v175, %v635
    %v656 = vadd.f32 %v178, %v637
    %v657 = vadd.f32 %v180, %v639
    %v658 = vadd.f32 %v183, %v641
    %v659 = vadd.f32 %v185, %v643
    %v660 = vadd.f32 %v652, %v492
    %v661 = vadd.f32 %v653, %v494
    %v662 = vadd.f32 %v654, %v496
    %v663 = vadd.f32 %v655, %v498
    %v664 = vadd.f32 %v656, %v500
    %v665 = vadd.f32 %v657, %v502
    %v666 = vadd.f32 %v658, %v504
    %v667 = vadd.f32 %v659, %v506
    %v668 = vadd.f32 %v660, %v532
    %v669 = vadd.f32 %v661, %v534
    %v670 = vadd.f32 %v662, %v536
    %v671 = vadd.f32 %v663, %v538
    %v672 = vadd.f32 %v664, %v540
    %v673 = vadd.f32 %v665, %v542
    %v674 = vadd.f32 %v666, %v544
    %v675 = vadd.f32 %v667, %v546
    %v676 = vrot.slane %v168, 4
    %v677 = vrot.slane %v170, 4
    %v678 = vrot.slane %v173, 4
    %v679 = vrot.slane %v175, 4
    %v680 = vrot.slane %v178, 4
    %v681 = vrot.slane %v180, 4
    %v682 = vrot.slane %v183, 4
    %v683 = vrot.slane %v185, 4
    %684 = vrot.lane.b32.xlu0 %v676, 64
    %v685 = vpop.permute.xlu0 %684
    %686 = vrot.lane.b32.xlu0 %v677, 64
    %v687 = vpop.permute.xlu0 %686
    %688 = vrot.lane.b32.xlu0 %v678, 64
    %v689 = vpop.permute.xlu0 %688
    %690 = vrot.lane.b32.xlu0 %v679, 64
    %v691 = vpop.permute.xlu0 %690
    %692 = vrot.lane.b32.xlu0 %v680, 64
    %v693 = vpop.permute.xlu0 %692
    %694 = vrot.lane.b32.xlu0 %v681, 64
    %v695 = vpop.permute.xlu0 %694
    %696 = vrot.lane.b32.xlu0 %v682, 64
    %v697 = vpop.permute.xlu0 %696
    %698 = vrot.lane.b32.xlu0 %v683, 64
    %v699 = vpop.permute.xlu0 %698
    %v708 = vadd.f32 %v668, %v685
    %v709 = vadd.f32 %v669, %v687
    %v710 = vadd.f32 %v670, %v689
    %v711 = vadd.f32 %v671, %v691
    %v712 = vadd.f32 %v672, %v693
    %v713 = vadd.f32 %v673, %v695
    %v714 = vadd.f32 %v674, %v697
    %v715 = vadd.f32 %v675, %v699
    %vm716 = vcmask 388352
    %v717 = vsel %vm716, %v708, -inf
    %v718 = vrot.slane %v717, 4
    %v719 = vmax.f32 %v717, %v718
    %v720 = vrot.slane %v719, 2
    %v721 = vmax.f32 %v719, %v720
    %v722 = vrot.slane %v721, 1
    %v723 = vmax.f32 %v721, %v722
    %v724 = vsel %vm716, %v709, -inf
    %v725 = vrot.slane %v724, 4
    %v726 = vmax.f32 %v724, %v725
    %v727 = vrot.slane %v726, 2
    %v728 = vmax.f32 %v726, %v727
    %v729 = vrot.slane %v728, 1
    %v730 = vmax.f32 %v728, %v729
    %v731 = vsel %vm716, %v710, -inf
    %v732 = vrot.slane %v731, 4
    %v733 = vmax.f32 %v731, %v732
    %v734 = vrot.slane %v733, 2
    %v735 = vmax.f32 %v733, %v734
    %v736 = vrot.slane %v735, 1
    %v737 = vmax.f32 %v735, %v736
    %v738 = vsel %vm716, %v711, -inf
    %v739 = vrot.slane %v738, 4
    %v740 = vmax.f32 %v738, %v739
    %v741 = vrot.slane %v740, 2
    %v742 = vmax.f32 %v740, %v741
    %v743 = vrot.slane %v742, 1
    %v744 = vmax.f32 %v742, %v743
    %v745 = vsel %vm716, %v712, -inf
    %v746 = vrot.slane %v745, 4
    %v747 = vmax.f32 %v745, %v746
    %v748 = vrot.slane %v747, 2
    %v749 = vmax.f32 %v747, %v748
    %v750 = vrot.slane %v749, 1
    %v751 = vmax.f32 %v749, %v750
    %v752 = vsel %vm716, %v713, -inf
    %v753 = vrot.slane %v752, 4
    %v754 = vmax.f32 %v752, %v753
    %v755 = vrot.slane %v754, 2
    %v756 = vmax.f32 %v754, %v755
    %v757 = vrot.slane %v756, 1
    %v758 = vmax.f32 %v756, %v757
    %v759 = vsel %vm716, %v714, -inf
    %v760 = vrot.slane %v759, 4
    %v761 = vmax.f32 %v759, %v760
    %v762 = vrot.slane %v761, 2
    %v763 = vmax.f32 %v761, %v762
    %v764 = vrot.slane %v763, 1
    %v765 = vmax.f32 %v763, %v764
    %v766 = vsel %vm716, %v715, -inf
    %v767 = vrot.slane %v766, 4
    %v768 = vmax.f32 %v766, %v767
    %v769 = vrot.slane %v768, 2
    %v770 = vmax.f32 %v768, %v769
    %v771 = vrot.slane %v770, 1
    %v772 = vmax.f32 %v770, %v771
    %v781 = vrot.slane %v197, 1
    %v782 = vrot.slane %v199, 1
    %v783 = vrot.slane %v202, 1
    %v784 = vrot.slane %v204, 1
    %v785 = vrot.slane %v207, 1
    %v786 = vrot.slane %v209, 1
    %v787 = vrot.slane %v212, 1
    %v788 = vrot.slane %v214, 1
    %789 = vrot.lane.b32.xlu0 %v781, 112
    %v790 = vpop.permute.xlu0 %789
    %791 = vrot.lane.b32.xlu0 %v782, 112
    %v792 = vpop.permute.xlu0 %791
    %793 = vrot.lane.b32.xlu0 %v783, 112
    %v794 = vpop.permute.xlu0 %793
    %795 = vrot.lane.b32.xlu0 %v784, 112
    %v796 = vpop.permute.xlu0 %795
    %797 = vrot.lane.b32.xlu0 %v785, 112
    %v798 = vpop.permute.xlu0 %797
    %799 = vrot.lane.b32.xlu0 %v786, 112
    %v800 = vpop.permute.xlu0 %799
    %801 = vrot.lane.b32.xlu0 %v787, 112
    %v802 = vpop.permute.xlu0 %801
    %803 = vrot.lane.b32.xlu0 %v788, 112
    %v804 = vpop.permute.xlu0 %803
    %v813 = vadd.f32 %v168, %v790
    %v814 = vadd.f32 %v170, %v792
    %v815 = vadd.f32 %v173, %v794
    %v816 = vadd.f32 %v175, %v796
    %v817 = vadd.f32 %v178, %v798
    %v818 = vadd.f32 %v180, %v800
    %v819 = vadd.f32 %v183, %v802
    %v820 = vadd.f32 %v185, %v804
    %v821 = vrot.slane %v197, 2
    %v822 = vrot.slane %v199, 2
    %v823 = vrot.slane %v202, 2
    %v824 = vrot.slane %v204, 2
    %v825 = vrot.slane %v207, 2
    %v826 = vrot.slane %v209, 2
    %v827 = vrot.slane %v212, 2
    %v828 = vrot.slane %v214, 2
    %829 = vrot.lane.b32.xlu0 %v821, 96
    %v830 = vpop.permute.xlu0 %829
    %831 = vrot.lane.b32.xlu0 %v822, 96
    %v832 = vpop.permute.xlu0 %831
    %833 = vrot.lane.b32.xlu0 %v823, 96
    %v834 = vpop.permute.xlu0 %833
    %835 = vrot.lane.b32.xlu0 %v824, 96
    %v836 = vpop.permute.xlu0 %835
    %837 = vrot.lane.b32.xlu0 %v825, 96
    %v838 = vpop.permute.xlu0 %837
    %839 = vrot.lane.b32.xlu0 %v826, 96
    %v840 = vpop.permute.xlu0 %839
    %841 = vrot.lane.b32.xlu0 %v827, 96
    %v842 = vpop.permute.xlu0 %841
    %843 = vrot.lane.b32.xlu0 %v828, 96
    %v844 = vpop.permute.xlu0 %843
    %v853 = vadd.f32 %v813, %v830
    %v854 = vadd.f32 %v814, %v832
    %v855 = vadd.f32 %v815, %v834
    %v856 = vadd.f32 %v816, %v836
    %v857 = vadd.f32 %v817, %v838
    %v858 = vadd.f32 %v818, %v840
    %v859 = vadd.f32 %v819, %v842
    %v860 = vadd.f32 %v820, %v844
    %v861 = vrot.slane %v197, 3
    %v862 = vrot.slane %v199, 3
    %v863 = vrot.slane %v202, 3
    %v864 = vrot.slane %v204, 3
    %v865 = vrot.slane %v207, 3
    %v866 = vrot.slane %v209, 3
    %v867 = vrot.slane %v212, 3
    %v868 = vrot.slane %v214, 3
    %869 = vrot.lane.b32.xlu0 %v861, 80
    %v870 = vpop.permute.xlu0 %869
    %871 = vrot.lane.b32.xlu0 %v862, 80
    %v872 = vpop.permute.xlu0 %871
    %873 = vrot.lane.b32.xlu0 %v863, 80
    %v874 = vpop.permute.xlu0 %873
    %875 = vrot.lane.b32.xlu0 %v864, 80
    %v876 = vpop.permute.xlu0 %875
    %877 = vrot.lane.b32.xlu0 %v865, 80
    %v878 = vpop.permute.xlu0 %877
    %879 = vrot.lane.b32.xlu0 %v866, 80
    %v880 = vpop.permute.xlu0 %879
    %881 = vrot.lane.b32.xlu0 %v867, 80
    %v882 = vpop.permute.xlu0 %881
    %883 = vrot.lane.b32.xlu0 %v868, 80
    %v884 = vpop.permute.xlu0 %883
    %v893 = vadd.f32 %v853, %v870
    %v894 = vadd.f32 %v854, %v872
    %v895 = vadd.f32 %v855, %v874
    %v896 = vadd.f32 %v856, %v876
    %v897 = vadd.f32 %v857, %v878
    %v898 = vadd.f32 %v858, %v880
    %v899 = vadd.f32 %v859, %v882
    %v900 = vadd.f32 %v860, %v884
    %v901 = vrot.slane %v197, 4
    %v902 = vrot.slane %v199, 4
    %v903 = vrot.slane %v202, 4
    %v904 = vrot.slane %v204, 4
    %v905 = vrot.slane %v207, 4
    %v906 = vrot.slane %v209, 4
    %v907 = vrot.slane %v212, 4
    %v908 = vrot.slane %v214, 4
    %909 = vrot.lane.b32.xlu0 %v901, 64
    %v910 = vpop.permute.xlu0 %909
    %911 = vrot.lane.b32.xlu0 %v902, 64
    %v912 = vpop.permute.xlu0 %911
    %913 = vrot.lane.b32.xlu0 %v903, 64
    %v914 = vpop.permute.xlu0 %913
    %915 = vrot.lane.b32.xlu0 %v904, 64
    %v916 = vpop.permute.xlu0 %915
    %917 = vrot.lane.b32.xlu0 %v905, 64
    %v918 = vpop.permute.xlu0 %917
    %919 = vrot.lane.b32.xlu0 %v906, 64
    %v920 = vpop.permute.xlu0 %919
    %921 = vrot.lane.b32.xlu0 %v907, 64
    %v922 = vpop.permute.xlu0 %921
    %923 = vrot.lane.b32.xlu0 %v908, 64
    %v924 = vpop.permute.xlu0 %923
    %v933 = vadd.f32 %v893, %v910
    %v934 = vadd.f32 %v894, %v912
    %v935 = vadd.f32 %v895, %v914
    %v936 = vadd.f32 %v896, %v916
    %v937 = vadd.f32 %v897, %v918
    %v938 = vadd.f32 %v898, %v920
    %v939 = vadd.f32 %v899, %v922
    %v940 = vadd.f32 %v900, %v924
    %v941 = vrot.slane %v197, 5
    %v942 = vrot.slane %v199, 5
    %v943 = vrot.slane %v202, 5
    %v944 = vrot.slane %v204, 5
    %v945 = vrot.slane %v207, 5
    %v946 = vrot.slane %v209, 5
    %v947 = vrot.slane %v212, 5
    %v948 = vrot.slane %v214, 5
    %949 = vrot.lane.b32.xlu0 %v941, 48
    %v950 = vpop.permute.xlu0 %949
    %951 = vrot.lane.b32.xlu0 %v942, 48
    %v952 = vpop.permute.xlu0 %951
    %953 = vrot.lane.b32.xlu0 %v943, 48
    %v954 = vpop.permute.xlu0 %953
    %955 = vrot.lane.b32.xlu0 %v944, 48
    %v956 = vpop.permute.xlu0 %955
    %957 = vrot.lane.b32.xlu0 %v945, 48
    %v958 = vpop.permute.xlu0 %957
    %959 = vrot.lane.b32.xlu0 %v946, 48
    %v960 = vpop.permute.xlu0 %959
    %961 = vrot.lane.b32.xlu0 %v947, 48
    %v962 = vpop.permute.xlu0 %961
    %963 = vrot.lane.b32.xlu0 %v948, 48
    %v964 = vpop.permute.xlu0 %963
    %v973 = vadd.f32 %v933, %v950
    %v974 = vadd.f32 %v934, %v952
    %v975 = vadd.f32 %v935, %v954
    %v976 = vadd.f32 %v936, %v956
    %v977 = vadd.f32 %v937, %v958
    %v978 = vadd.f32 %v938, %v960
    %v979 = vadd.f32 %v939, %v962
    %v980 = vadd.f32 %v940, %v964
    %vm981 = vcmask 1043328
    %v982 = vsel %vm981, %v973, -inf
    %v983 = vrot.slane %v982, 4
    %v984 = vmax.f32 %v982, %v983
    %v985 = vrot.slane %v984, 2
    %v986 = vmax.f32 %v984, %v985
    %v987 = vrot.slane %v986, 1
    %v988 = vmax.f32 %v986, %v987
    %v989 = vsel %vm981, %v974, -inf
    %v990 = vrot.slane %v989, 4
    %v991 = vmax.f32 %v989, %v990
    %v992 = vrot.slane %v991, 2
    %v993 = vmax.f32 %v991, %v992
    %v994 = vrot.slane %v993, 1
    %v995 = vmax.f32 %v993, %v994
    %v996 = vsel %vm981, %v975, -inf
    %v997 = vrot.slane %v996, 4
    %v998 = vmax.f32 %v996, %v997
    %v999 = vrot.slane %v998, 2
    %v1000 = vmax.f32 %v998, %v999
    %v1001 = vrot.slane %v1000, 1
    %v1002 = vmax.f32 %v1000, %v1001
    %v1003 = vsel %vm981, %v976, -inf
    %v1004 = vrot.slane %v1003, 4
    %v1005 = vmax.f32 %v1003, %v1004
    %v1006 = vrot.slane %v1005, 2
    %v1007 = vmax.f32 %v1005, %v1006
    %v1008 = vrot.slane %v1007, 1
    %v1009 = vmax.f32 %v1007, %v1008
    %v1010 = vsel %vm981, %v977, -inf
    %v1011 = vrot.slane %v1010, 4
    %v1012 = vmax.f32 %v1010, %v1011
    %v1013 = vrot.slane %v1012, 2
    %v1014 = vmax.f32 %v1012, %v1013
    %v1015 = vrot.slane %v1014, 1
    %v1016 = vmax.f32 %v1014, %v1015
    %v1017 = vsel %vm981, %v978, -inf
    %v1018 = vrot.slane %v1017, 4
    %v1019 = vmax.f32 %v1017, %v1018
    %v1020 = vrot.slane %v1019, 2
    %v1021 = vmax.f32 %v1019, %v1020
    %v1022 = vrot.slane %v1021, 1
    %v1023 = vmax.f32 %v1021, %v1022
    %v1024 = vsel %vm981, %v979, -inf
    %v1025 = vrot.slane %v1024, 4
    %v1026 = vmax.f32 %v1024, %v1025
    %v1027 = vrot.slane %v1026, 2
    %v1028 = vmax.f32 %v1026, %v1027
    %v1029 = vrot.slane %v1028, 1
    %v1030 = vmax.f32 %v1028, %v1029
    %v1031 = vsel %vm981, %v980, -inf
    %v1032 = vrot.slane %v1031, 4
    %v1033 = vmax.f32 %v1031, %v1032
    %v1034 = vrot.slane %v1033, 2
    %v1035 = vmax.f32 %v1033, %v1034
    %v1036 = vrot.slane %v1035, 1
    %v1037 = vmax.f32 %v1035, %v1036
    %vm1046 = vcmask 1041409
    %v1047 = vsel %vm1046, %v230, %v223
    %vm1048 = vcmask 1042434
    %v1049 = vsel %vm1048, %v237, %v1047
    %vm1050 = vcmask 1043459
    %v1051 = vsel %vm1050, %v244, %v1049
    %vm1052 = vcmask 1044484
    %v1053 = vsel %vm1052, %v251, %v1051
    %vm1054 = vcmask 1045509
    %v1055 = vsel %vm1054, %v258, %v1053
    %vm1056 = vcmask 1046534
    %v1057 = vsel %vm1056, %v265, %v1055
    %vm1058 = vcmask 1047559
    %v1059 = vsel %vm1058, %v272, %v1057
    %v1069 = vsel %vm1046, %v335, %v328
    %v1070 = vsel %vm1048, %v342, %v1069
    %v1071 = vsel %vm1050, %v349, %v1070
    %v1072 = vsel %vm1052, %v356, %v1071
    %v1073 = vsel %vm1054, %v363, %v1072
    %v1074 = vsel %vm1056, %v370, %v1073
    %v1075 = vsel %vm1058, %v377, %v1074
    %v1085 = vsel %vm1046, %v432, %v425
    %v1086 = vsel %vm1048, %v439, %v1085
    %v1087 = vsel %vm1050, %v446, %v1086
    %v1088 = vsel %vm1052, %v453, %v1087
    %v1089 = vsel %vm1054, %v460, %v1088
    %v1090 = vsel %vm1056, %v467, %v1089
    %v1091 = vsel %vm1058, %v474, %v1090
    %1092 = vrot.lane.b32.xlu0 %v1091, 112
    %v1093 = vpop.permute.xlu0 %1092
    %v1103 = vsel %vm1046, %v577, %v570
    %v1104 = vsel %vm1048, %v584, %v1103
    %v1105 = vsel %vm1050, %v591, %v1104
    %v1106 = vsel %vm1052, %v598, %v1105
    %v1107 = vsel %vm1054, %v605, %v1106
    %v1108 = vsel %vm1056, %v612, %v1107
    %v1109 = vsel %vm1058, %v619, %v1108
    %1110 = vrot.lane.b32.xlu0 %v1109, 80
    %v1111 = vpop.permute.xlu0 %1110
    %v1121 = vsel %vm1046, %v730, %v723
    %v1122 = vsel %vm1048, %v737, %v1121
    %v1123 = vsel %vm1050, %v744, %v1122
    %v1124 = vsel %vm1052, %v751, %v1123
    %v1125 = vsel %vm1054, %v758, %v1124
    %v1126 = vsel %vm1056, %v765, %v1125
    %v1127 = vsel %vm1058, %v772, %v1126
    %1128 = vrot.lane.b32.xlu0 %v1127, 32
    %v1129 = vpop.permute.xlu0 %1128
    %v1139 = vsel %vm1046, %v995, %v988
    %v1140 = vsel %vm1048, %v1002, %v1139
    %v1141 = vsel %vm1050, %v1009, %v1140
    %v1142 = vsel %vm1052, %v1016, %v1141
    %v1143 = vsel %vm1054, %v1023, %v1142
    %v1144 = vsel %vm1056, %v1030, %v1143
    %v1145 = vsel %vm1058, %v1037, %v1144
    %1146 = vrot.lane.b32.xlu0 %v1145, 96
    %v1147 = vpop.permute.xlu0 %1146
    %v1149 = vsel %vm216, %v1059, %v1075
    %v1150 = vsel %vm116, %v1149, %v1093
    %vm1151 = vcmask 392192
    %v1152 = vsel %vm1151, %v1150, %v1111
    %vm1153 = vcmask 523264
    %v1154 = vsel %vm1153, %v1152, %v1129
    %vm1155 = vcmask 654336
    %v1156 = vsel %vm1155, %v1154, %v1147
    %vm1157 = vcmask 785408
    %v1158 = vsel %vm1157, %v1156, 0.0
    %v1159 = vld [vmem:[%s2] sm:$0x1]
    %v1161 = vperm.slane %v1159, 0
    %v1163 = vadd.f32 %v1158, %v1161
    %v1164 = vmax.f32 %v1163, 0.0
    %1165 = vst [vmem:[#allocation7] sm:$0xff] %v1164
    // Predicated region
    $region22: #{tpu_custom_call.1} parent=1 // pred_check
      _
    $region23: #{tpu_custom_call.1} parent=1 // pred_check_branch
      %1167 = sbr.rel (0) target = $region25
    $region24: #{tpu_custom_call.1} parent=1 // pred_region
      %1169 = vsyncadd [#allocation4], 0
      %s1171 = sshll.u32 [#allocation7], 4
      %s1172 = int_to_ptr.vmem [resolvable:$true] %s1171
      %s1173 = sshll.u32 %s3, 4
      %s1174 = int_to_ptr.hbm [resolvable:$true] %s1173
      %1176 = dma.vmem_to_hbm [thread:$0]  %s1172, 128, %s1174, [#allocation4]
    $region25: #{tpu_custom_call.1} parent=1 // pred_fallthru
      _
    // Predicated region
    $region26: #{tpu_custom_call.1} parent=1 // pred_check
      _
    $region27: #{tpu_custom_call.1} parent=1 // pred_check_branch
      %1178 = sbr.rel (0) target = $region29
    $region28: #{tpu_custom_call.1} parent=1 // pred_region
      %1180 = dma.done [#allocation4], 128
    $region29: #{tpu_custom_call.1} parent=1 // pred_fallthru
      _
    %1181 = vsyncpa [#allocation3], 1
    %1182 = vsyncpa [#allocation6], 1
    %1183 = vsyncpa [#allocation4], 1

</llo_original>
